<compile_context>
chip_gen: v7x
topology: tpu7x:2x2x1
jax: 0.10.0
libtpu: 0.0.40
codegen_flags: <defaults>
</compile_context>

<pallas_src>
import functools

import jax
import jax.numpy as jnp
from jax.experimental import pallas as pl
from jax.experimental.pallas import tpu as pltpu


def _channel_attention_kernel(x_ref, w1t_ref, w2t_ref, o_ref, sum_acc, max_acc,
                              *, hw):
    # x_ref:   (bB, C, tHW) block — channels on sublanes, spatial on lanes.
    # w1t_ref: (C, Cr)      w2t_ref: (Cr, C)   (tiny, VMEM-resident, f32)
    # o_ref:   (bB, C) block (C on lanes -> unmasked, lane-dense stores)
    # sum_acc / max_acc: (bB, C) f32 scratch, persist across the spatial axis.
    j = pl.program_id(1)
    n_hw = pl.num_programs(1)
    blk = x_ref.shape[2]
    rem = hw % blk                      # Python int: 0 <=> every tile is full

    @pl.when(j == 0)
    def _init():
        sum_acc[...] = jnp.zeros_like(sum_acc)
        max_acc[...] = jnp.full_like(max_acc, -jnp.inf)

    def accumulate(x_sum_f32, x_max_native):
        # Sum accumulates in f32 (accuracy); max stays in native dtype and
        # only the (bB, C) reduction result is cast.
        sum_acc[...] += jnp.sum(x_sum_f32, axis=2)
        max_acc[...] = jnp.maximum(
            max_acc[...], jnp.max(x_max_native, axis=2).astype(jnp.float32))

    if rem == 0:
        # No partial tile exists for this launch: single mask-free path.
        x = x_ref[...]
        accumulate(x.astype(jnp.float32), x)
    else:
        is_last = j == n_hw - 1

        @pl.when(j != n_hw - 1)
        def _full_tile():               # steady state: zero masking work
            x = x_ref[...]
            accumulate(x.astype(jnp.float32), x)

        @pl.when(is_last)
        def _partial_tile():
            x = x_ref[...]
            # Lane-vector iota, broadcast by jnp.where — no (C, blk) int32 temp.
            lane = jax.lax.broadcasted_iota(jnp.int32, (1, 1, blk), 2)
            valid = lane < rem
            accumulate(jnp.where(valid, x.astype(jnp.float32), 0.0),
                       jnp.where(valid, x, -jnp.inf))

    @pl.when(j == n_hw - 1)
    def _finalize():
        avg = sum_acc[...] * (1.0 / hw)                 # (bB, C) f32
        mx = max_acc[...]                               # (bB, C) f32
        w1t = w1t_ref[...]                              # (C, Cr)
        w2t = w2t_ref[...]                              # (Cr, C)
        # fc2 linearity: fc2(relu(a)) + fc2(relu(b)) == fc2(relu(a) + relu(b)).
        h = (jnp.maximum(jnp.dot(avg, w1t, preferred_element_type=jnp.float32), 0.0)
             + jnp.maximum(jnp.dot(mx, w1t, preferred_element_type=jnp.float32), 0.0))
        y = jnp.dot(h, w2t, preferred_element_type=jnp.float32)   # (bB, C)
        o_ref[...] = jax.nn.sigmoid(y).astype(o_ref.dtype)


def _pick_tiles(B, C, HW, itemsize, block_hw, block_b):
    """Generation-aware tile sizes + scoped-VMEM limit."""
    try:
        vmem_cap = int(pltpu.get_tpu_info().vmem_capacity_bytes)
    except Exception:
        vmem_cap = 64 * 1024 * 1024     # conservative: safe on every generation
    # Smaller-VMEM / higher-bandwidth parts (v7x-class: 64 MiB, ~3.2 TB/s per
    # core) want bigger tiles to amortize the ~0.35 us per-grid-step overhead;
    # 128-MiB parts (v5e/v6e) are comfortable at 8 MiB.
    target = 16 * 1024 * 1024 if vmem_cap <= 96 * 1024 * 1024 else 8 * 1024 * 1024

    if block_hw is None:
        row_bytes = C * itemsize
        t = max(128, ((target // row_bytes) // 128) * 128)
        block_hw = HW if HW <= t else t
    assert block_hw == HW or (block_hw % 128 == 0 and block_hw < HW), (
        "block_hw must equal H*W or be a multiple of 128 smaller than H*W")

    if block_b is None:
        block_b = 1
        if block_hw == HW:
            # Large-C / small-HW regime: stream several batch rows per step so
            # DMA per step stays in the high-roofline regime and the finalize
            # matmuls are batched.
            x_row_bytes = C * HW * itemsize
            want = max(1, target // max(1, x_row_bytes))
            if B <= want:
                block_b = B
            else:
                d = 8                      # keep sublane tiling of the output
                while d <= want:
                    if B % d == 0:
                        block_b = d
                    d += 8
    assert B % block_b == 0, "block_b must divide the batch size"
    assert block_b == B or block_b == 1 or block_b % 8 == 0

    x_block_bytes = block_b * C * block_hw * itemsize
    vmem_limit = int(max(16 * 1024 * 1024,
                         min(vmem_cap - 16 * 1024 * 1024,
                             2 * x_block_bytes + 8 * 1024 * 1024)))
    return block_b, block_hw, vmem_limit


def channel_attention(x_nchw, w1, w2, *, block_hw=None, block_b=None):
    """x_nchw: (B, C, H, W); w1: (Cr, C) from Conv2d(C, Cr, 1); w2: (C, Cr)."""
    B, C, H, W = x_nchw.shape
    Cr, C_in = w1.shape
    assert C_in == C and w2.shape == (C, Cr)
    HW = H * W

    # Free reshape (no transpose, no dtype conversion) — keep NCHW order so
    # channels land on sublanes and the spatial axis on lanes.
    x = x_nchw.reshape(B, C, HW)
    w1t = jnp.asarray(w1, jnp.float32).T     # (C, Cr)
    w2t = jnp.asarray(w2, jnp.float32).T     # (Cr, C)

    itemsize = jnp.dtype(x.dtype).itemsize
    block_b, block_hw, vmem_limit = _pick_tiles(B, C, HW, itemsize,
                                                block_hw, block_b)
    n_b = B // block_b
    n_hw = pl.cdiv(HW, block_hw)

    kernel = functools.partial(_channel_attention_kernel, hw=HW)

    out = pl.pallas_call(
        kernel,
        out_shape=jax.ShapeDtypeStruct((B, C), x.dtype),
        grid_spec=pltpu.PrefetchScalarGridSpec(
            num_scalar_prefetch=0,
            grid=(n_b, n_hw),
            in_specs=[
                pl.BlockSpec((block_b, C, block_hw), lambda i, j: (i, 0, j)),
                pl.BlockSpec((C, Cr), lambda i, j: (0, 0)),   # resident weights
                pl.BlockSpec((Cr, C), lambda i, j: (0, 0)),
            ],
            out_specs=pl.BlockSpec((block_b, C), lambda i, j: (i, 0)),
            scratch_shapes=[
                pltpu.VMEM((block_b, C), jnp.float32),   # running sum
                pltpu.VMEM((block_b, C), jnp.float32),   # running max
            ],
        ),
        compiler_params=pltpu.CompilerParams(
            dimension_semantics=("parallel", "arbitrary"),
            vmem_limit_bytes=vmem_limit,
        ),
    )(x, w1t, w2t)

    # TODO(synk): when B // block_b == 1 on v7x (2 TensorCores) the grid has a
    # single parallel slot; a split-HW two-pass (per-core partial pooled stats
    # + tiny merge/MLP step) would be needed to keep both cores busy.
    return out.reshape(B, C, 1, 1)


def _reference(x_nchw, w1, w2):
    # Pure-JAX reference mirroring the PyTorch forward.
    xf = x_nchw.astype(jnp.float32)
    avg = jnp.mean(xf, axis=(2, 3))              # (B, C)
    mx = jnp.max(xf, axis=(2, 3))                # (B, C)

    def mlp(v):
        h = jnp.maximum(v @ w1.T, 0.0)           # (B, Cr)
        return h @ w2.T                          # (B, C)

    out = jax.nn.sigmoid(mlp(avg) + mlp(mx))
    return out[:, :, None, None]


if __name__ == "__main__":
    B, C, H, W = 2, 64, 16, 16
    ratio = 16
    Cr = C // ratio

    key = jax.random.PRNGKey(0)
    kx, k1, k2, kx2 = jax.random.split(key, 4)

    x = jax.random.normal(kx, (B, C, H, W), dtype=jnp.float32)
    # Deterministic synthetic weights matching Conv2d(C, Cr, 1) / Conv2d(Cr, C, 1).
    w1 = jax.random.normal(k1, (Cr, C), dtype=jnp.float32) * 0.1
    w2 = jax.random.normal(k2, (C, Cr), dtype=jnp.float32) * 0.1

    # Case 1: auto tiling (whole spatial extent in one tile, batch-blocked).
    out = channel_attention(x, w1, w2)
    out = jax.block_until_ready(out)
    ref = _reference(x, w1, w2)
    assert out.shape == (B, C, 1, 1)
    assert jnp.allclose(out, ref, atol=1e-5, rtol=1e-5)

    # Case 2: multi-tile spatial reduction with a partial (masked) last tile.
    x2 = jax.random.normal(kx2, (1, C, 20, 20), dtype=jnp.float32)   # HW=400
    out2 = jax.block_until_ready(channel_attention(x2, w1, w2, block_hw=128))
    ref2 = _reference(x2, w1, w2)
    assert out2.shape == (1, C, 1, 1)
    assert jnp.allclose(out2, ref2, atol=1e-5, rtol=1e-5)

    print("KERNEL_OK")
</pallas_src>

<mosaic_0001>
module attributes {stable_mosaic.version = 11 : i64} {
  func.func @_channel_attention_kernel(%arg0: i32, %arg1: i32, %arg2: memref<2x64x256xf32, #tpu.memory_space<vmem>>, %arg3: memref<64x4xf32, #tpu.memory_space<vmem>>, %arg4: memref<4x64xf32, #tpu.memory_space<vmem>>, %arg5: memref<2x64xf32, #tpu.memory_space<vmem>>, %arg6: memref<2x64xf32, #tpu.memory_space<vmem>>, %arg7: memref<2x64xf32, #tpu.memory_space<vmem>>) attributes {dimension_semantics = [#tpu.dimension_semantics<parallel>, #tpu.dimension_semantics<arbitrary>], iteration_bounds = array<i64: 1, 1>, scalar_prefetch = 0 : i64, scratch_operands = 2 : i64, tpu.core_type = #tpu.core_type<tc>, window_params = [{transform_indices = @transform_0, window_bounds = array<i64: 2, 64, 256>}, {pipeline_mode = #tpu.pipeline_mode<synchronous>, transform_indices = @transform_1, window_bounds = array<i64: 64, 4>}, {pipeline_mode = #tpu.pipeline_mode<synchronous>, transform_indices = @transform_2, window_bounds = array<i64: 4, 64>}, {transform_indices = @transform_3, window_bounds = array<i64: 2, 64>}]} {
    %c0_i32 = arith.constant 0 : i32
    %0 = arith.cmpi eq, %arg1, %c0_i32 : i32
    %1 = arith.extui %0 : i1 to i32
    %c0_i32_0 = arith.constant 0 : i32
    %2 = arith.cmpi ne, %1, %c0_i32_0 : i32
    scf.if %2 {
      %cst_14 = arith.constant 0.000000e+00 : f32
      %15 = vector.broadcast %cst_14 : f32 to vector<2x64xf32>
      %c0_15 = arith.constant 0 : index
      %c0_16 = arith.constant 0 : index
      %16 = vector.load %arg6[%c0_15, %c0_16] : memref<2x64xf32, #tpu.memory_space<vmem>>, vector<2x64xf32>
      tpu.vector_store %arg6[%c0_15, %c0_16], %15 {strides = array<i32>} : memref<2x64xf32, #tpu.memory_space<vmem>>, vector<2x64xf32>,
      %cst_17 = arith.constant 0xFF800000 : f32
      %17 = vector.broadcast %cst_17 : f32 to vector<2x64xf32>
      %c0_18 = arith.constant 0 : index
      %c0_19 = arith.constant 0 : index
      %18 = vector.load %arg7[%c0_18, %c0_19] : memref<2x64xf32, #tpu.memory_space<vmem>>, vector<2x64xf32>
      tpu.vector_store %arg7[%c0_18, %c0_19], %17 {strides = array<i32>} : memref<2x64xf32, #tpu.memory_space<vmem>>, vector<2x64xf32>,
    } else {
    }
    %c0 = arith.constant 0 : index
    %c0_1 = arith.constant 0 : index
    %c0_2 = arith.constant 0 : index
    %3 = vector.load %arg2[%c0, %c0_1, %c0_2] : memref<2x64x256xf32, #tpu.memory_space<vmem>>, vector<2x64x256xf32>
    %c0_3 = arith.constant 0 : index
    %c0_4 = arith.constant 0 : index
    %4 = vector.load %arg6[%c0_3, %c0_4] : memref<2x64xf32, #tpu.memory_space<vmem>>, vector<2x64xf32>
    %cst = arith.constant dense<0.000000e+00> : vector<2x64xf32>
    %5 = vector.multi_reduction <add>, %3, %cst [2] : vector<2x64x256xf32> to vector<2x64xf32>
    %6 = arith.addf %4, %5 : vector<2x64xf32>
    %c0_5 = arith.constant 0 : index
    %c0_6 = arith.constant 0 : index
    %7 = vector.load %arg6[%c0_5, %c0_6] : memref<2x64xf32, #tpu.memory_space<vmem>>, vector<2x64xf32>
    tpu.vector_store %arg6[%c0_5, %c0_6], %6 {strides = array<i32>} : memref<2x64xf32, #tpu.memory_space<vmem>>, vector<2x64xf32>,
    %c0_7 = arith.constant 0 : index
    %c0_8 = arith.constant 0 : index
    %8 = vector.load %arg7[%c0_7, %c0_8] : memref<2x64xf32, #tpu.memory_space<vmem>>, vector<2x64xf32>
    %cst_9 = arith.constant dense<0xFF800000> : vector<2x64xf32>
    %9 = vector.multi_reduction <maximumf>, %3, %cst_9 [2] : vector<2x64x256xf32> to vector<2x64xf32>
    %10 = arith.maximumf %8, %9 : vector<2x64xf32>
    %c0_10 = arith.constant 0 : index
    %c0_11 = arith.constant 0 : index
    %11 = vector.load %arg7[%c0_10, %c0_11] : memref<2x64xf32, #tpu.memory_space<vmem>>, vector<2x64xf32>
    tpu.vector_store %arg7[%c0_10, %c0_11], %10 {strides = array<i32>} : memref<2x64xf32, #tpu.memory_space<vmem>>, vector<2x64xf32>,
    %c0_i32_12 = arith.constant 0 : i32
    %12 = arith.cmpi eq, %arg1, %c0_i32_12 : i32
    %13 = arith.extui %12 : i1 to i32
    %c0_i32_13 = arith.constant 0 : i32
    %14 = arith.cmpi ne, %13, %c0_i32_13 : i32
    scf.if %14 {
      %c0_14 = arith.constant 0 : index
      %c0_15 = arith.constant 0 : index
      %15 = vector.load %arg6[%c0_14, %c0_15] : memref<2x64xf32, #tpu.memory_space<vmem>>, vector<2x64xf32>
      %cst_16 = arith.constant 3.906250e-03 : f32
      %16 = vector.broadcast %cst_16 : f32 to vector<2x64xf32>
      %17 = arith.mulf %15, %16 : vector<2x64xf32>
      %c0_17 = arith.constant 0 : index
      %c0_18 = arith.constant 0 : index
      %18 = vector.load %arg7[%c0_17, %c0_18] : memref<2x64xf32, #tpu.memory_space<vmem>>, vector<2x64xf32>
      %c0_19 = arith.constant 0 : index
      %c0_20 = arith.constant 0 : index
      %19 = vector.load %arg3[%c0_19, %c0_20] : memref<64x4xf32, #tpu.memory_space<vmem>>, vector<64x4xf32>
      %c0_21 = arith.constant 0 : index
      %c0_22 = arith.constant 0 : index
      %20 = vector.load %arg4[%c0_21, %c0_22] : memref<4x64xf32, #tpu.memory_space<vmem>>, vector<4x64xf32>
      %cst_23 = arith.constant dense<0.000000e+00> : vector<2x4xf32>
      %21 = tpu.matmul %17, %19, %cst_23 {dimension_numbers = #tpu.dot_dimension_numbers<[1], [0], [0], [1], [0, 0, 1, 1], [], []>} : vector<2x64xf32>, vector<64x4xf32>, vector<2x4xf32> -> vector<2x4xf32>
      %cst_24 = arith.constant 0.000000e+00 : f32
      %22 = vector.broadcast %cst_24 : f32 to vector<2x4xf32>
      %23 = arith.maximumf %21, %22 : vector<2x4xf32>
      %cst_25 = arith.constant dense<0.000000e+00> : vector<2x4xf32>
      %24 = tpu.matmul %18, %19, %cst_25 {dimension_numbers = #tpu.dot_dimension_numbers<[1], [0], [0], [1], [0, 0, 1, 1], [], []>} : vector<2x64xf32>, vector<64x4xf32>, vector<2x4xf32> -> vector<2x4xf32>
      %cst_26 = arith.constant 0.000000e+00 : f32
      %25 = vector.broadcast %cst_26 : f32 to vector<2x4xf32>
      %26 = arith.maximumf %24, %25 : vector<2x4xf32>
      %27 = arith.addf %23, %26 : vector<2x4xf32>
      %cst_27 = arith.constant dense<0.000000e+00> : vector<2x64xf32>
      %28 = tpu.matmul %27, %20, %cst_27 {dimension_numbers = #tpu.dot_dimension_numbers<[1], [0], [0], [1], [0, 0, 1, 1], [], []>} : vector<2x4xf32>, vector<4x64xf32>, vector<2x64xf32> -> vector<2x64xf32>
      %29 = arith.negf %28 : vector<2x64xf32>
      %30 = math.exp %29 : vector<2x64xf32>
      %cst_28 = arith.constant 1.000000e+00 : f32
      %31 = vector.broadcast %cst_28 : f32 to vector<2x64xf32>
      %32 = arith.addf %31, %30 : vector<2x64xf32>
      %33 = arith.divf %31, %32 : vector<2x64xf32>
      %c0_29 = arith.constant 0 : index
      %c0_30 = arith.constant 0 : index
      %34 = vector.load %arg5[%c0_29, %c0_30] : memref<2x64xf32, #tpu.memory_space<vmem>>, vector<2x64xf32>
      tpu.vector_store %arg5[%c0_29, %c0_30], %33 {strides = array<i32>} : memref<2x64xf32, #tpu.memory_space<vmem>>, vector<2x64xf32>,
    } else {
    }
    return
  }
  func.func @transform_0(%arg0: i32, %arg1: i32) -> (i32, i32, i32) {
    %c0_i32 = arith.constant 0 : i32
    %c0_i32_0 = arith.constant 0 : i32
    return %arg0, %c0_i32, %arg1 : i32, i32, i32
  }
  func.func @transform_1(%arg0: i32, %arg1: i32) -> (i32, i32) {
    %c0_i32 = arith.constant 0 : i32
    %c0_i32_0 = arith.constant 0 : i32
    %c0_i32_1 = arith.constant 0 : i32
    return %c0_i32, %c0_i32_0 : i32, i32
  }
  func.func @transform_2(%arg0: i32, %arg1: i32) -> (i32, i32) {
    %c0_i32 = arith.constant 0 : i32
    %c0_i32_0 = arith.constant 0 : i32
    %c0_i32_1 = arith.constant 0 : i32
    return %c0_i32, %c0_i32_0 : i32, i32
  }
  func.func @transform_3(%arg0: i32, %arg1: i32) -> (i32, i32) {
    %c0_i32 = arith.constant 0 : i32
    %c0_i32_0 = arith.constant 0 : i32
    return %arg0, %c0_i32 : i32, i32
  }
}

</mosaic_0001>

<llo_original>
// kernel: tpu_custom_call.1
$region0: #{tpu_custom_call.1}
  #allocation0 [shape = 'u32[]', space=smem, size = 0x4, offset = 0x4, fixed_abs, tag = 'smem constant byte address 0x4 - core index']
  #allocation1 [shape = 'u32[144,128]{1,0:T(1,128)}', space=vmem, size = 0x12000, scoped, tag = 'internal scratch']
  #allocation2 [shape = 'f32[2,64]{1,0:T(2,128)}', space=vmem, size = 0x400, scoped, tag = 'scratch operand']
  #allocation3 [shape = 'f32[2,64]{1,0:T(2,128)}', space=vmem, size = 0x400, scoped, tag = 'scratch operand']
  %s0 = inlined_call_operand.hbm [shape: f32[2,64,256], index: 0, kind: input, shape index: {}]
  %s1 = inlined_call_operand.vmem [shape: f32[64,4], index: 1, kind: input, shape index: {}]
  %s2 = inlined_call_operand.vmem [shape: f32[4,64], index: 2, kind: input, shape index: {}]
  %s3 = inlined_call_operand.hbm [shape: f32[2,64], index: 3, kind: output, shape index: {}]
  %s4 = sld [smem:[#allocation0]]
  $region34: #{tpu_custom_call.1} parent=0
    _
  %s6 = ssub.s32 1, %s4
  %s7 = scalar_select 0, %s6, %s4
  $region1: #{tpu_custom_call.1} parent=0
    #allocation4 [shape = 'u8[131072]{0}', space=vmem, size = 0x20000, scoped, tag = 'input window, operand 0, single buffered']
    #allocation5 [shape = 's32[1]{0}', space=sflag, size = 0x4, scoped, tag = 'scoped memory for tpu_custom_call.1']
    #allocation6 [shape = 's32[1]{0}', space=sflag, size = 0x4, scoped, tag = 'scoped memory for tpu_custom_call.1']
    #allocation7 [shape = 'u8[1024]{0}', space=vmem, size = 0x400, scoped, tag = 'output window, operand 0, single buffered']
    %8 = vsyncpa [#allocation5], 0
    %9 = vsyncpa [#allocation6], 0
    // Predicated region
    $region2: #{tpu_custom_call.1} parent=1 // pred_check
      _
    $region3: #{tpu_custom_call.1} parent=1 // pred_check_branch
      %11 = sbr.rel (0) target = $region5
    $region4: #{tpu_custom_call.1} parent=1 // pred_region
      %s13 = ssub.s32 4096, 4096
      %14 = vsyncadd [#allocation5], %s13
      %s15 = sshll.u32 [#allocation4], 4
      %s16 = int_to_ptr.vmem [resolvable:$true] %s15
      %21 = dma.hbm_to_vmem [thread:$0]  %s0, 4096, %s16, [#allocation5], 256, 256, 16
    $region5: #{tpu_custom_call.1} parent=1 // pred_fallthru
      _
    // Predicated region
    $region6: #{tpu_custom_call.1} parent=1 // pred_check
      _
    $region7: #{tpu_custom_call.1} parent=1 // pred_check_branch
      %23 = sbr.rel (0) target = $region9
    $region8: #{tpu_custom_call.1} parent=1 // pred_region
      _
    $region9: #{tpu_custom_call.1} parent=1 // pred_fallthru
      _
    // Predicated region
    $region10: #{tpu_custom_call.1} parent=1 // pred_check
      _
    $region11: #{tpu_custom_call.1} parent=1 // pred_check_branch
      %25 = sbr.rel (0) target = $region13
    $region12: #{tpu_custom_call.1} parent=1 // pred_region
      _
    $region13: #{tpu_custom_call.1} parent=1 // pred_fallthru
      _
    // Predicated region
    $region14: #{tpu_custom_call.1} parent=1 // pred_check
      _
    $region15: #{tpu_custom_call.1} parent=1 // pred_check_branch
      %27 = sbr.rel (0) target = $region17
    $region16: #{tpu_custom_call.1} parent=1 // pred_region
      %28 = dma.done [#allocation5], 4096
    $region17: #{tpu_custom_call.1} parent=1 // pred_fallthru
      _
    %p29 = scmp.eq.s32.totalorder 0, 0
    // Predicated region
    $region18: #{tpu_custom_call.1} parent=1 // pred_check
      %p30 = pneg %p29
    $region19: #{tpu_custom_call.1} parent=1 // pred_check_branch
      %32 = sbr.rel (%p30) target = $region21
    $region20: #{tpu_custom_call.1} parent=1 // pred_region
      %vm33 = vcmask 517120
      %34 = vst.msk [vmem:[#allocation2] sm:$0x3] %vm33, 0.0
      %35 = vst.msk [vmem:[#allocation3] sm:$0x3] %vm33, -inf
    $region21: #{tpu_custom_call.1} parent=1 // pred_fallthru
      _
    %v36 = vld [vmem:[#allocation4] sm:$0xff]
    %v37 = vld [vmem:[#allocation4 + $0x8] sm:$0xff]
    %v38 = vld [vmem:[#allocation4 + $0x10] sm:$0xff]
    %v39 = vld [vmem:[#allocation4 + $0x18] sm:$0xff]
    %v40 = vld [vmem:[#allocation4 + $0x20] sm:$0xff]
    %v41 = vld [vmem:[#allocation4 + $0x28] sm:$0xff]
    %v42 = vld [vmem:[#allocation4 + $0x30] sm:$0xff]
    %v43 = vld [vmem:[#allocation4 + $0x38] sm:$0xff]
    %v44 = vld [vmem:[#allocation4 + $0x40] sm:$0xff]
    %v45 = vld [vmem:[#allocation4 + $0x48] sm:$0xff]
    %v46 = vld [vmem:[#allocation4 + $0x50] sm:$0xff]
    %v47 = vld [vmem:[#allocation4 + $0x58] sm:$0xff]
    %v48 = vld [vmem:[#allocation4 + $0x60] sm:$0xff]
    %v49 = vld [vmem:[#allocation4 + $0x68] sm:$0xff]
    %v50 = vld [vmem:[#allocation4 + $0x70] sm:$0xff]
    %v51 = vld [vmem:[#allocation4 + $0x78] sm:$0xff]
    %v52 = vld [vmem:[#allocation4 + $0x80] sm:$0xff]
    %v53 = vld [vmem:[#allocation4 + $0x88] sm:$0xff]
    %v54 = vld [vmem:[#allocation4 + $0x90] sm:$0xff]
    %v55 = vld [vmem:[#allocation4 + $0x98] sm:$0xff]
    %v56 = vld [vmem:[#allocation4 + $0xa0] sm:$0xff]
    %v57 = vld [vmem:[#allocation4 + $0xa8] sm:$0xff]
    %v58 = vld [vmem:[#allocation4 + $0xb0] sm:$0xff]
    %v59 = vld [vmem:[#allocation4 + $0xb8] sm:$0xff]
    %v60 = vld [vmem:[#allocation4 + $0xc0] sm:$0xff]
    %v61 = vld [vmem:[#allocation4 + $0xc8] sm:$0xff]
    %v62 = vld [vmem:[#allocation4 + $0xd0] sm:$0xff]
    %v63 = vld [vmem:[#allocation4 + $0xd8] sm:$0xff]
    %v64 = vld [vmem:[#allocation4 + $0xe0] sm:$0xff]
    %v65 = vld [vmem:[#allocation4 + $0xe8] sm:$0xff]
    %v66 = vld [vmem:[#allocation4 + $0xf0] sm:$0xff]
    %v67 = vld [vmem:[#allocation4 + $0xf8] sm:$0xff]
    %v68 = vld [vmem:[#allocation2] sm:$0x3]
    %v69 = vadd.f32 %v36, %v37
    %70 = vadd.xlane.f32.xlu0 %v69
    %v71 = vpop.xlane.xlu0 %70
    %v72 = vadd.f32 %v38, %v39
    %73 = vadd.xlane.f32.xlu0 %v72
    %v74 = vpop.xlane.xlu0 %73
    %v75 = vadd.f32 %v40, %v41
    %76 = vadd.xlane.f32.xlu0 %v75
    %v77 = vpop.xlane.xlu0 %76
    %v78 = vadd.f32 %v42, %v43
    %79 = vadd.xlane.f32.xlu0 %v78
    %v80 = vpop.xlane.xlu0 %79
    %v81 = vadd.f32 %v44, %v45
    %82 = vadd.xlane.f32.xlu0 %v81
    %v83 = vpop.xlane.xlu0 %82
    %v84 = vadd.f32 %v46, %v47
    %85 = vadd.xlane.f32.xlu0 %v84
    %v86 = vpop.xlane.xlu0 %85
    %v87 = vadd.f32 %v48, %v49
    %88 = vadd.xlane.f32.xlu0 %v87
    %v89 = vpop.xlane.xlu0 %88
    %v90 = vadd.f32 %v50, %v51
    %91 = vadd.xlane.f32.xlu0 %v90
    %v92 = vpop.xlane.xlu0 %91
    %v93 = vadd.f32 %v52, %v53
    %94 = vadd.xlane.f32.xlu0 %v93
    %v95 = vpop.xlane.xlu0 %94
    %v96 = vadd.f32 %v54, %v55
    %97 = vadd.xlane.f32.xlu0 %v96
    %v98 = vpop.xlane.xlu0 %97
    %v99 = vadd.f32 %v56, %v57
    %100 = vadd.xlane.f32.xlu0 %v99
    %v101 = vpop.xlane.xlu0 %100
    %v102 = vadd.f32 %v58, %v59
    %103 = vadd.xlane.f32.xlu0 %v102
    %v104 = vpop.xlane.xlu0 %103
    %v105 = vadd.f32 %v60, %v61
    %106 = vadd.xlane.f32.xlu0 %v105
    %v107 = vpop.xlane.xlu0 %106
    %v108 = vadd.f32 %v62, %v63
    %109 = vadd.xlane.f32.xlu0 %v108
    %v110 = vpop.xlane.xlu0 %109
    %v111 = vadd.f32 %v64, %v65
    %112 = vadd.xlane.f32.xlu0 %v111
    %v113 = vpop.xlane.xlu0 %112
    %v114 = vadd.f32 %v66, %v67
    %115 = vadd.xlane.f32.xlu0 %v114
    %v116 = vpop.xlane.xlu0 %115
    %v133 = vlaneseq
    %v134 = vand.u32 %v133, 127
    %v135 = vlaneseq
    %v136 = vshrl.u32 %v135, 7
    %v137 = vsub.s32 %v134, %v136
    %v138 = vrot.slane %v71, %v137
    %v139 = vadd.s32 %v134, 4294967288
    %v140 = vlaneseq
    %v141 = vshrl.u32 %v140, 7
    %v142 = vsub.s32 %v139, %v141
    %v143 = vrot.slane %v74, %v142
    %vm144 = vcmask 130112
    %v145 = vsel %vm144, %v143, %v138
    %v146 = vadd.s32 %v134, 4294967280
    %v147 = vlaneseq
    %v148 = vshrl.u32 %v147, 7
    %v149 = vsub.s32 %v146, %v148
    %v150 = vrot.slane %v77, %v149
    %vm151 = vcmask 195712
    %v152 = vsel %vm151, %v150, %v145
    %v153 = vadd.s32 %v134, 4294967272
    %v154 = vlaneseq
    %v155 = vshrl.u32 %v154, 7
    %v156 = vsub.s32 %v153, %v155
    %v157 = vrot.slane %v80, %v156
    %vm158 = vcmask 261312
    %v159 = vsel %vm158, %v157, %v152
    %v160 = vadd.s32 %v134, 4294967264
    %v161 = vlaneseq
    %v162 = vshrl.u32 %v161, 7
    %v163 = vsub.s32 %v160, %v162
    %v164 = vrot.slane %v83, %v163
    %vm165 = vcmask 326912
    %v166 = vsel %vm165, %v164, %v159
    %v167 = vadd.s32 %v134, 4294967256
    %v168 = vlaneseq
    %v169 = vshrl.u32 %v168, 7
    %v170 = vsub.s32 %v167, %v169
    %v171 = vrot.slane %v86, %v170
    %vm172 = vcmask 392512
    %v173 = vsel %vm172, %v171, %v166
    %v174 = vadd.s32 %v134, 4294967248
    %v175 = vlaneseq
    %v176 = vshrl.u32 %v175, 7
    %v177 = vsub.s32 %v174, %v176
    %v178 = vrot.slane %v89, %v177
    %vm179 = vcmask 458112
    %v180 = vsel %vm179, %v178, %v173
    %v181 = vadd.s32 %v134, 4294967240
    %v182 = vlaneseq
    %v183 = vshrl.u32 %v182, 7
    %v184 = vsub.s32 %v181, %v183
    %v185 = vrot.slane %v92, %v184
    %vm186 = vcmask 523712
    %v187 = vsel %vm186, %v185, %v180
    %v188 = vlaneseq
    %v189 = vshrl.u32 %v188, 7
    %v190 = vsub.s32 %v134, %v189
    %v191 = vrot.slane %v95, %v190
    %v192 = vlaneseq
    %v193 = vshrl.u32 %v192, 7
    %v194 = vsub.s32 %v139, %v193
    %v195 = vrot.slane %v98, %v194
    %v196 = vsel %vm144, %v195, %v191
    %v197 = vlaneseq
    %v198 = vshrl.u32 %v197, 7
    %v199 = vsub.s32 %v146, %v198
    %v200 = vrot.slane %v101, %v199
    %v201 = vsel %vm151, %v200, %v196
    %v202 = vlaneseq
    %v203 = vshrl.u32 %v202, 7
    %v204 = vsub.s32 %v153, %v203
    %v205 = vrot.slane %v104, %v204
    %v206 = vsel %vm158, %v205, %v201
    %v207 = vlaneseq
    %v208 = vshrl.u32 %v207, 7
    %v209 = vsub.s32 %v160, %v208
    %v210 = vrot.slane %v107, %v209
    %v211 = vsel %vm165, %v210, %v206
    %v212 = vlaneseq
    %v213 = vshrl.u32 %v212, 7
    %v214 = vsub.s32 %v167, %v213
    %v215 = vrot.slane %v110, %v214
    %v216 = vsel %vm172, %v215, %v211
    %v217 = vlaneseq
    %v218 = vshrl.u32 %v217, 7
    %v219 = vsub.s32 %v174, %v218
    %v220 = vrot.slane %v113, %v219
    %v221 = vsel %vm179, %v220, %v216
    %v222 = vlaneseq
    %v223 = vshrl.u32 %v222, 7
    %v224 = vsub.s32 %v181, %v223
    %v225 = vrot.slane %v116, %v224
    %v226 = vsel %vm186, %v225, %v221
    %vm227 = vcmask 1041409
    %v228 = vsel %vm227, %v226, %v187
    %v230 = vadd.f32 %v68, %v228
    %vm231 = vcmask 517120
    %232 = vst.msk [vmem:[#allocation2] sm:$0x3] %vm231, %v230
    %v233 = vld [vmem:[#allocation3] sm:$0x3]
    %v234 = vmax.f32 %v36, %v37
    %235 = vmax.xlane.f32.xlu0 %v234
    %v236 = vpop.xlane.xlu0 %235
    %v237 = vmax.f32 %v38, %v39
    %238 = vmax.xlane.f32.xlu0 %v237
    %v239 = vpop.xlane.xlu0 %238
    %v240 = vmax.f32 %v40, %v41
    %241 = vmax.xlane.f32.xlu0 %v240
    %v242 = vpop.xlane.xlu0 %241
    %v243 = vmax.f32 %v42, %v43
    %244 = vmax.xlane.f32.xlu0 %v243
    %v245 = vpop.xlane.xlu0 %244
    %v246 = vmax.f32 %v44, %v45
    %247 = vmax.xlane.f32.xlu0 %v246
    %v248 = vpop.xlane.xlu0 %247
    %v249 = vmax.f32 %v46, %v47
    %250 = vmax.xlane.f32.xlu0 %v249
    %v251 = vpop.xlane.xlu0 %250
    %v252 = vmax.f32 %v48, %v49
    %253 = vmax.xlane.f32.xlu0 %v252
    %v254 = vpop.xlane.xlu0 %253
    %v255 = vmax.f32 %v50, %v51
    %256 = vmax.xlane.f32.xlu0 %v255
    %v257 = vpop.xlane.xlu0 %256
    %v258 = vmax.f32 %v52, %v53
    %259 = vmax.xlane.f32.xlu0 %v258
    %v260 = vpop.xlane.xlu0 %259
    %v261 = vmax.f32 %v54, %v55
    %262 = vmax.xlane.f32.xlu0 %v261
    %v263 = vpop.xlane.xlu0 %262
    %v264 = vmax.f32 %v56, %v57
    %265 = vmax.xlane.f32.xlu0 %v264
    %v266 = vpop.xlane.xlu0 %265
    %v267 = vmax.f32 %v58, %v59
    %268 = vmax.xlane.f32.xlu0 %v267
    %v269 = vpop.xlane.xlu0 %268
    %v270 = vmax.f32 %v60, %v61
    %271 = vmax.xlane.f32.xlu0 %v270
    %v272 = vpop.xlane.xlu0 %271
    %v273 = vmax.f32 %v62, %v63
    %274 = vmax.xlane.f32.xlu0 %v273
    %v275 = vpop.xlane.xlu0 %274
    %v276 = vmax.f32 %v64, %v65
    %277 = vmax.xlane.f32.xlu0 %v276
    %v278 = vpop.xlane.xlu0 %277
    %v279 = vmax.f32 %v66, %v67
    %280 = vmax.xlane.f32.xlu0 %v279
    %v281 = vpop.xlane.xlu0 %280
    %v298 = vlaneseq
    %v299 = vshrl.u32 %v298, 7
    %v300 = vsub.s32 %v134, %v299
    %v301 = vrot.slane %v236, %v300
    %v302 = vlaneseq
    %v303 = vshrl.u32 %v302, 7
    %v304 = vsub.s32 %v139, %v303
    %v305 = vrot.slane %v239, %v304
    %v306 = vsel %vm144, %v305, %v301
    %v307 = vlaneseq
    %v308 = vshrl.u32 %v307, 7
    %v309 = vsub.s32 %v146, %v308
    %v310 = vrot.slane %v242, %v309
    %v311 = vsel %vm151, %v310, %v306
    %v312 = vlaneseq
    %v313 = vshrl.u32 %v312, 7
    %v314 = vsub.s32 %v153, %v313
    %v315 = vrot.slane %v245, %v314
    %v316 = vsel %vm158, %v315, %v311
    %v317 = vlaneseq
    %v318 = vshrl.u32 %v317, 7
    %v319 = vsub.s32 %v160, %v318
    %v320 = vrot.slane %v248, %v319
    %v321 = vsel %vm165, %v320, %v316
    %v322 = vlaneseq
    %v323 = vshrl.u32 %v322, 7
    %v324 = vsub.s32 %v167, %v323
    %v325 = vrot.slane %v251, %v324
    %v326 = vsel %vm172, %v325, %v321
    %v327 = vlaneseq
    %v328 = vshrl.u32 %v327, 7
    %v329 = vsub.s32 %v174, %v328
    %v330 = vrot.slane %v254, %v329
    %v331 = vsel %vm179, %v330, %v326
    %v332 = vlaneseq
    %v333 = vshrl.u32 %v332, 7
    %v334 = vsub.s32 %v181, %v333
    %v335 = vrot.slane %v257, %v334
    %v336 = vsel %vm186, %v335, %v331
    %v337 = vlaneseq
    %v338 = vshrl.u32 %v337, 7
    %v339 = vsub.s32 %v134, %v338
    %v340 = vrot.slane %v260, %v339
    %v341 = vlaneseq
    %v342 = vshrl.u32 %v341, 7
    %v343 = vsub.s32 %v139, %v342
    %v344 = vrot.slane %v263, %v343
    %v345 = vsel %vm144, %v344, %v340
    %v346 = vlaneseq
    %v347 = vshrl.u32 %v346, 7
    %v348 = vsub.s32 %v146, %v347
    %v349 = vrot.slane %v266, %v348
    %v350 = vsel %vm151, %v349, %v345
    %v351 = vlaneseq
    %v352 = vshrl.u32 %v351, 7
    %v353 = vsub.s32 %v153, %v352
    %v354 = vrot.slane %v269, %v353
    %v355 = vsel %vm158, %v354, %v350
    %v356 = vlaneseq
    %v357 = vshrl.u32 %v356, 7
    %v358 = vsub.s32 %v160, %v357
    %v359 = vrot.slane %v272, %v358
    %v360 = vsel %vm165, %v359, %v355
    %v361 = vlaneseq
    %v362 = vshrl.u32 %v361, 7
    %v363 = vsub.s32 %v167, %v362
    %v364 = vrot.slane %v275, %v363
    %v365 = vsel %vm172, %v364, %v360
    %v366 = vlaneseq
    %v367 = vshrl.u32 %v366, 7
    %v368 = vsub.s32 %v174, %v367
    %v369 = vrot.slane %v278, %v368
    %v370 = vsel %vm179, %v369, %v365
    %v371 = vlaneseq
    %v372 = vshrl.u32 %v371, 7
    %v373 = vsub.s32 %v181, %v372
    %v374 = vrot.slane %v281, %v373
    %v375 = vsel %vm186, %v374, %v370
    %v376 = vsel %vm227, %v375, %v336
    %v378 = vmax.f32 %v233, %v376
    %379 = vst.msk [vmem:[#allocation3] sm:$0x3] %vm231, %v378
    // Predicated region
    $region22: #{tpu_custom_call.1} parent=1 // pred_check
      %p380 = pneg %p29
    $region23: #{tpu_custom_call.1} parent=1 // pred_check_branch
      %382 = sbr.rel (%p380) target = $region25
    $region24: #{tpu_custom_call.1} parent=1 // pred_region
      %v383 = vld [vmem:[#allocation2] sm:$0x3]
      %v384 = vmul.f32 %v383, 0.00390625
      %v385 = vld [vmem:[#allocation3] sm:$0x3]
      %v386 = vld [vmem:[%s1] sm:$0xff]
      %v387 = vld [vmem:[%s1 + $0x8] sm:$0xff]
      %v388 = vld [vmem:[%s1 + $0x10] sm:$0xff]
      %v389 = vld [vmem:[%s1 + $0x18] sm:$0xff]
      %v390 = vld [vmem:[%s1 + $0x20] sm:$0xff]
      %v391 = vld [vmem:[%s1 + $0x28] sm:$0xff]
      %v392 = vld [vmem:[%s1 + $0x30] sm:$0xff]
      %v393 = vld [vmem:[%s1 + $0x38] sm:$0xff]
      %v394 = vld [vmem:[%s2] sm:$0xf]
      %vm395 = vcmask 523264
      %v397 = vsel %vm395, %v384, 0
      %399 = vmatprep.subr.mxu0 0.0
      %400 = vmatpush1.msra.mxu0 %v386
      %401 = vmatprep.subr.mxu0 0.0
      %402 = vmatpush1.msra.mxu0 %v387
      %403 = vmatprep.subr.mxu0 0.0
      %404 = vmatpush1.msra.mxu0 %v388
      %405 = vmatprep.subr.mxu0 0.0
      %406 = vmatpush1.msra.mxu0 %v389
      %407 = vmatprep.subr.mxu0 0.0
      %408 = vmatpush1.msra.mxu0 %v390
      %409 = vmatprep.subr.mxu0 0.0
      %410 = vmatpush1.msra.mxu0 %v391
      %411 = vmatprep.subr.mxu0 0.0
      %412 = vmatpush1.msra.mxu0 %v392
      %413 = vmatprep.subr.mxu0 0.0
      %414 = vmatpush1.msra.mxu0 %v393
      %415 = vmatprep.subr.mxu0 0.0
      %416 = vmatpush1.msra.mxu0 0.0
      %417 = vmatprep.subr.mxu0 0.0
      %418 = vmatpush1.msra.mxu0 0.0
      %419 = vmatprep.subr.mxu0 0.0
      %420 = vmatpush1.msra.mxu0 0.0
      %421 = vmatprep.subr.mxu0 0.0
      %422 = vmatpush1.msra.mxu0 0.0
      %423 = vmatprep.subr.mxu0 0.0
      %424 = vmatpush1.msra.mxu0 0.0
      %425 = vmatprep.subr.mxu0 0.0
      %426 = vmatpush1.msra.mxu0 0.0
      %427 = vmatprep.subr.mxu0 0.0
      %428 = vmatpush1.msra.mxu0 0.0
      %429 = vmatprep.subr.mxu0 0.0
      %430 = vmatpush1.msra.mxu0 0.0
      %431 = vmatprep.subr.mxu0 0.0
      %432 = vmatpush1.msra.mxu0 0.0
      %433 = vmatprep.subr.mxu0 0.0
      %434 = vmatpush1.msra.mxu0 0.0
      %435 = vmatprep.subr.mxu0 0.0
      %436 = vmatpush1.msra.mxu0 0.0
      %437 = vmatprep.subr.mxu0 0.0
      %438 = vmatpush1.msra.mxu0 0.0
      %439 = vmatprep.subr.mxu0 0.0
      %440 = vmatpush1.msra.mxu0 0.0
      %441 = vmatprep.subr.mxu0 0.0
      %442 = vmatpush1.msra.mxu0 0.0
      %443 = vmatprep.subr.mxu0 0.0
      %444 = vmatpush1.msra.mxu0 0.0
      %445 = vmatprep.subr.mxu0 0.0
      %446 = vmatpush1.msra.mxu0 0.0
      %447 = vmatprep.subr.mxu0 0.0
      %448 = vmatpush1.msra.mxu0 0.0
      %449 = vmatprep.subr.mxu0 0.0
      %450 = vmatpush1.msra.mxu0 0.0
      %451 = vmatprep.subr.mxu0 0.0
      %452 = vmatpush1.msra.mxu0 0.0
      %453 = vmatprep.subr.mxu0 0.0
      %454 = vmatpush1.msra.mxu0 0.0
      %455 = vmatprep.subr.mxu0 0.0
      %456 = vmatpush1.msra.mxu0 0.0
      %457 = vmatprep.subr.mxu0 0.0
      %458 = vmatpush1.msra.mxu0 0.0
      %459 = vmatprep.subr.mxu0 0.0
      %460 = vmatpush1.msra.mxu0 0.0
      %461 = vmatprep.subr.mxu0 0.0
      %462 = vmatpush1.msra.mxu0 0.0
      %463 = vmatprep.mubr.f32.mxu0 0.0
      %464 = vmatmul.mubr.f32.gmra.mrb[0].mxu0 %v397
      %v465 = vpop.f32.mrb[0].mxu0
      %v466 = vadd.f32 0.0, %v465
      %v467 = vpop.f32.mrb[0].mxu0
      %468 = vdwg.mxu0
      %v469 = vmax.f32 %v466, 0.0
      %v471 = vsel %vm395, %v385, 0
      %473 = vmatprep.subr.mxu0 0.0
      %474 = vmatpush1.msra.mxu0 %v386
      %475 = vmatprep.subr.mxu0 0.0
      %476 = vmatpush1.msra.mxu0 %v387
      %477 = vmatprep.subr.mxu0 0.0
      %478 = vmatpush1.msra.mxu0 %v388
      %479 = vmatprep.subr.mxu0 0.0
      %480 = vmatpush1.msra.mxu0 %v389
      %481 = vmatprep.subr.mxu0 0.0
      %482 = vmatpush1.msra.mxu0 %v390
      %483 = vmatprep.subr.mxu0 0.0
      %484 = vmatpush1.msra.mxu0 %v391
      %485 = vmatprep.subr.mxu0 0.0
      %486 = vmatpush1.msra.mxu0 %v392
      %487 = vmatprep.subr.mxu0 0.0
      %488 = vmatpush1.msra.mxu0 %v393
      %489 = vmatprep.subr.mxu0 0.0
      %490 = vmatpush1.msra.mxu0 0.0
      %491 = vmatprep.subr.mxu0 0.0
      %492 = vmatpush1.msra.mxu0 0.0
      %493 = vmatprep.subr.mxu0 0.0
      %494 = vmatpush1.msra.mxu0 0.0
      %495 = vmatprep.subr.mxu0 0.0
      %496 = vmatpush1.msra.mxu0 0.0
      %497 = vmatprep.subr.mxu0 0.0
      %498 = vmatpush1.msra.mxu0 0.0
      %499 = vmatprep.subr.mxu0 0.0
      %500 = vmatpush1.msra.mxu0 0.0
      %501 = vmatprep.subr.mxu0 0.0
      %502 = vmatpush1.msra.mxu0 0.0
      %503 = vmatprep.subr.mxu0 0.0
      %504 = vmatpush1.msra.mxu0 0.0
      %505 = vmatprep.subr.mxu0 0.0
      %506 = vmatpush1.msra.mxu0 0.0
      %507 = vmatprep.subr.mxu0 0.0
      %508 = vmatpush1.msra.mxu0 0.0
      %509 = vmatprep.subr.mxu0 0.0
      %510 = vmatpush1.msra.mxu0 0.0
      %511 = vmatprep.subr.mxu0 0.0
      %512 = vmatpush1.msra.mxu0 0.0
      %513 = vmatprep.subr.mxu0 0.0
      %514 = vmatpush1.msra.mxu0 0.0
      %515 = vmatprep.subr.mxu0 0.0
      %516 = vmatpush1.msra.mxu0 0.0
      %517 = vmatprep.subr.mxu0 0.0
      %518 = vmatpush1.msra.mxu0 0.0
      %519 = vmatprep.subr.mxu0 0.0
      %520 = vmatpush1.msra.mxu0 0.0
      %521 = vmatprep.subr.mxu0 0.0
      %522 = vmatpush1.msra.mxu0 0.0
      %523 = vmatprep.subr.mxu0 0.0
      %524 = vmatpush1.msra.mxu0 0.0
      %525 = vmatprep.subr.mxu0 0.0
      %526 = vmatpush1.msra.mxu0 0.0
      %527 = vmatprep.subr.mxu0 0.0
      %528 = vmatpush1.msra.mxu0 0.0
      %529 = vmatprep.subr.mxu0 0.0
      %530 = vmatpush1.msra.mxu0 0.0
      %531 = vmatprep.subr.mxu0 0.0
      %532 = vmatpush1.msra.mxu0 0.0
      %533 = vmatprep.subr.mxu0 0.0
      %534 = vmatpush1.msra.mxu0 0.0
      %535 = vmatprep.subr.mxu0 0.0
      %536 = vmatpush1.msra.mxu0 0.0
      %537 = vmatprep.mubr.f32.mxu0 0.0
      %538 = vmatmul.mubr.f32.gmra.mrb[0].mxu0 %v471
      %v539 = vpop.f32.mrb[0].mxu0
      %v540 = vadd.f32 0.0, %v539
      %v541 = vpop.f32.mrb[0].mxu0
      %542 = vdwg.mxu0
      %v543 = vmax.f32 %v540, 0.0
      %v544 = vadd.f32 %v469, %v543
      %vm545 = vcmask 31744
      %v547 = vsel %vm545, %v544, 0
      %vm549 = vcmask 1043456
      %v551 = vsel %vm549, %v394, 0
      %553 = vmatprep.subr.mxu0 0.0
      %554 = vmatpush1.msra.mxu0 %v551
      %555 = vmatprep.subr.mxu0 0.0
      %556 = vmatpush1.msra.mxu0 0.0
      %557 = vmatprep.subr.mxu0 0.0
      %558 = vmatpush1.msra.mxu0 0.0
      %559 = vmatprep.subr.mxu0 0.0
      %560 = vmatpush1.msra.mxu0 0.0
      %561 = vmatprep.subr.mxu0 0.0
      %562 = vmatpush1.msra.mxu0 0.0
      %563 = vmatprep.subr.mxu0 0.0
      %564 = vmatpush1.msra.mxu0 0.0
      %565 = vmatprep.subr.mxu0 0.0
      %566 = vmatpush1.msra.mxu0 0.0
      %567 = vmatprep.subr.mxu0 0.0
      %568 = vmatpush1.msra.mxu0 0.0
      %569 = vmatprep.subr.mxu0 0.0
      %570 = vmatpush1.msra.mxu0 0.0
      %571 = vmatprep.subr.mxu0 0.0
      %572 = vmatpush1.msra.mxu0 0.0
      %573 = vmatprep.subr.mxu0 0.0
      %574 = vmatpush1.msra.mxu0 0.0
      %575 = vmatprep.subr.mxu0 0.0
      %576 = vmatpush1.msra.mxu0 0.0
      %577 = vmatprep.subr.mxu0 0.0
      %578 = vmatpush1.msra.mxu0 0.0
      %579 = vmatprep.subr.mxu0 0.0
      %580 = vmatpush1.msra.mxu0 0.0
      %581 = vmatprep.subr.mxu0 0.0
      %582 = vmatpush1.msra.mxu0 0.0
      %583 = vmatprep.subr.mxu0 0.0
      %584 = vmatpush1.msra.mxu0 0.0
      %585 = vmatprep.subr.mxu0 0.0
      %586 = vmatpush1.msra.mxu0 0.0
      %587 = vmatprep.subr.mxu0 0.0
      %588 = vmatpush1.msra.mxu0 0.0
      %589 = vmatprep.subr.mxu0 0.0
      %590 = vmatpush1.msra.mxu0 0.0
      %591 = vmatprep.subr.mxu0 0.0
      %592 = vmatpush1.msra.mxu0 0.0
      %593 = vmatprep.subr.mxu0 0.0
      %594 = vmatpush1.msra.mxu0 0.0
      %595 = vmatprep.subr.mxu0 0.0
      %596 = vmatpush1.msra.mxu0 0.0
      %597 = vmatprep.subr.mxu0 0.0
      %598 = vmatpush1.msra.mxu0 0.0
      %599 = vmatprep.subr.mxu0 0.0
      %600 = vmatpush1.msra.mxu0 0.0
      %601 = vmatprep.subr.mxu0 0.0
      %602 = vmatpush1.msra.mxu0 0.0
      %603 = vmatprep.subr.mxu0 0.0
      %604 = vmatpush1.msra.mxu0 0.0
      %605 = vmatprep.subr.mxu0 0.0
      %606 = vmatpush1.msra.mxu0 0.0
      %607 = vmatprep.subr.mxu0 0.0
      %608 = vmatpush1.msra.mxu0 0.0
      %609 = vmatprep.subr.mxu0 0.0
      %610 = vmatpush1.msra.mxu0 0.0
      %611 = vmatprep.subr.mxu0 0.0
      %612 = vmatpush1.msra.mxu0 0.0
      %613 = vmatprep.subr.mxu0 0.0
      %614 = vmatpush1.msra.mxu0 0.0
      %615 = vmatprep.subr.mxu0 0.0
      %616 = vmatpush1.msra.mxu0 0.0
      %617 = vmatprep.mubr.f32.mxu0 0.0
      %618 = vmatmul.mubr.f32.gmra.mrb[0].mxu0 %v547
      %v619 = vpop.f32.mrb[0].mxu0
      %v620 = vadd.f32 0.0, %v619
      %v621 = vpop.f32.mrb[0].mxu0
      %622 = vdwg.mxu0
      %v623 = vxor.u32 %v620, 2147483648
      %v624 = vmul.f32 %v623, 1.442695
      %v625 = vpow.pop %v624
      %v626 = vadd.f32 %v625, 1.0
      %v627 = vrcp.pop %v626
      %v628 = vmul.f32 1.0, %v627
      %629 = vst.msk [vmem:[#allocation7] sm:$0x3] %vm231, %v628
    $region25: #{tpu_custom_call.1} parent=1 // pred_fallthru
      _
    // Predicated region
    $region26: #{tpu_custom_call.1} parent=1 // pred_check
      _
    $region27: #{tpu_custom_call.1} parent=1 // pred_check_branch
      %631 = sbr.rel (0) target = $region29
    $region28: #{tpu_custom_call.1} parent=1 // pred_region
      %s633 = ssub.s32 32, 32
      %634 = vsyncadd [#allocation6], %s633
      %s636 = sshll.u32 [#allocation7], 4
      %s637 = int_to_ptr.vmem [resolvable:$true] %s636
      %639 = dma.vmem_to_hbm [thread:$0]  %s637, 32, %s3, [#allocation6]
    $region29: #{tpu_custom_call.1} parent=1 // pred_fallthru
      _
    // Predicated region
    $region30: #{tpu_custom_call.1} parent=1 // pred_check
      _
    $region31: #{tpu_custom_call.1} parent=1 // pred_check_branch
      %641 = sbr.rel (0) target = $region33
    $region32: #{tpu_custom_call.1} parent=1 // pred_region
      %642 = dma.done [#allocation6], 32
    $region33: #{tpu_custom_call.1} parent=1 // pred_fallthru
      _
    %643 = vsyncpa [#allocation5], 1
    %644 = vsyncpa [#allocation6], 1

</llo_original>
